<compile_context>
chip_gen: v7x
topology: tpu7x:2x2x1
jax: 0.10.0
libtpu: 0.0.40
codegen_flags: <defaults>
</compile_context>

<pallas_src>
import functools

import numpy as np
import jax
import jax.numpy as jnp
from jax.experimental import pallas as pl
from jax.experimental.pallas import tpu as pltpu


_TILE_M_CAP = 32768                      # ~13-18 MiB f32 working set per step
_VMEM_LIMIT_BYTES = 48 * 1024 * 1024     # raise scoped VMEM (v5e default 16 MiB);
                                         # still leaves headroom on v7x (64 MiB/TC)


def _mlp_kernel(xT_ref, w0c_ref, b0c_ref, w1t_ref, wot_ref, o_ref):
    # Layer 0 -- Linear(1, H0) + ReLU.  K == 1, so it's a VPU broadcast outer
    # product (never touches the MXU); kept in f32 (v5e has no bf16 VALU).
    # The augmented last row computes relu(0*x + 1) == 1 and carries the later
    # biases through the MXU matmuls (bias folding).
    h = jnp.maximum(w0c_ref[...] * xT_ref[...] + b0c_ref[...], 0.0)   # [H0+1, tm]

    # Hidden layer -- [H1+1, H0+1] @ [H0+1, tm] on the MXU, rows on lanes.
    # Bias is the last column of w1t; the last row re-emits the ones carrier.
    # Operands are narrowed to the weight dtype (bf16 when mxu_bf16=True).
    h = jnp.maximum(
        jnp.dot(w1t_ref[...], h.astype(w1t_ref.dtype),
                preferred_element_type=jnp.float32), 0.0)             # [H1+1, tm]

    # Output layer -- [O, H1+1] @ [H1+1, tm], bias folded, no activation.
    out = jnp.dot(wot_ref[...], h.astype(wot_ref.dtype),
                  preferred_element_type=jnp.float32)                 # [O, tm]
    o_ref[...] = out.astype(o_ref.dtype)


def _pick_tile_m(M):
    # Big tiles amortize the ~0.35 us per-grid-step pipeline overhead and make
    # the x/out DMAs big enough for HBM roofline.  Clamp so the parallel grid
    # keeps >= 2 steps when M allows it (v7x has 2 TensorCores).
    half = -(-M // 2)                      # cdiv(M, 2)
    half_aligned = -(-half // 256) * 256   # round up to 256 (lane/MXU friendly)
    return max(256, min(_TILE_M_CAP, half_aligned))


def flatten_input(x):
    """x[:, :4] flattened row-major into the lane-major [1, N*4] layout.

    Hoist this out of the hot path (it is a separate XLA pass over x) when
    calling repeatedly -- feed the result straight to mlps_forward_flat.
    """
    return x[:, :4].astype(jnp.float32).reshape(1, -1)


def _augment_params(params, mxu_bf16):
    """Column-major ("rows on lanes") parameter views with biases folded in."""
    (w0, b0), (w1, b1), (wo, bo) = params
    f32 = jnp.float32
    H0 = w1.shape[0]
    # Layer 0: extra row (w=0, b=1) -> relu(0*x + 1) == 1 ones-carrier.
    w0c = jnp.concatenate([w0.astype(f32).T, jnp.zeros((1, 1), f32)], axis=0)   # [H0+1, 1]
    b0c = jnp.concatenate([b0.astype(f32).T, jnp.ones((1, 1), f32)], axis=0)    # [H0+1, 1]
    # Hidden layer: [W1^T | b1^T] plus a [0...0, 1] row to re-emit the carrier.
    w1t = jnp.concatenate([w1.astype(f32).T, b1.astype(f32).T], axis=1)         # [H1, H0+1]
    ones_row = jnp.concatenate([jnp.zeros((1, H0), f32), jnp.ones((1, 1), f32)], axis=1)
    w1t = jnp.concatenate([w1t, ones_row], axis=0)                              # [H1+1, H0+1]
    # Output layer: [Wo^T | bo^T].
    wot = jnp.concatenate([wo.astype(f32).T, bo.astype(f32).T], axis=1)         # [O, H1+1]
    if mxu_bf16:
        w1t = w1t.astype(jnp.bfloat16)
        wot = wot.astype(jnp.bfloat16)
    return w0c, b0c, w1t, wot


def mlps_forward_flat(xT, params, *, tile_m=None, out_dtype=jnp.float32,
                      mxu_bf16=False):
    """Hot path.  xT: [1, M] f32 (see flatten_input).  Returns lane-major [O, M]."""
    M = xT.shape[1]
    H0 = params[1][0].shape[0]
    H1 = params[1][0].shape[1]
    w0c, b0c, w1t, wot = _augment_params(params, mxu_bf16)
    O = wot.shape[0]

    if tile_m is None:
        tile_m = _pick_tile_m(M)
    grid_m = pl.cdiv(M, tile_m)
    M_pad = grid_m * tile_m
    if M_pad != M:
        xT = jnp.pad(xT, ((0, 0), (0, M_pad - M)))

    out_itemsize = np.dtype(out_dtype).itemsize
    param_bytes = int(4 * (w0c.size + b0c.size)
                      + w1t.size * np.dtype(w1t.dtype).itemsize
                      + wot.size * np.dtype(wot.dtype).itemsize)
    cost = pl.CostEstimate(
        flops=int(2 * M_pad * (H0 + H0 * H1 + H1 * O)),
        transcendentals=0,
        bytes_accessed=int(4 * M_pad + out_itemsize * O * M_pad + param_bytes))

    out_t = pl.pallas_call(
        _mlp_kernel,
        out_shape=jax.ShapeDtypeStruct((O, M_pad), out_dtype),
        grid_spec=pltpu.PrefetchScalarGridSpec(
            num_scalar_prefetch=0,
            grid=(grid_m,),
            in_specs=[
                pl.BlockSpec((1, tile_m), lambda i: (0, i)),   # xT tile (lanes)
                pl.BlockSpec(w0c.shape, lambda i: (0, 0)),     # W0^T+carrier (resident)
                pl.BlockSpec(b0c.shape, lambda i: (0, 0)),     # b0^T+carrier
                pl.BlockSpec(w1t.shape, lambda i: (0, 0)),     # [W1^T | b1], +ones row
                pl.BlockSpec(wot.shape, lambda i: (0, 0)),     # [Wo^T | bo]
            ],
            out_specs=pl.BlockSpec((O, tile_m), lambda i: (0, i)),
        ),
        compiler_params=pltpu.CompilerParams(
            dimension_semantics=("parallel",),
            vmem_limit_bytes=_VMEM_LIMIT_BYTES),
        cost_estimate=cost,
    )(xT, w0c, b0c, w1t, wot)

    return out_t[:, :M]


def mlps_forward(x, params, *, tile_m=None, out_dtype=jnp.float32,
                 mxu_bf16=False, transposed_output=False):
    """x: [N, F] with F >= 4.

    transposed_output=False (default): returns [N, 4, O], exactly matching the
      module (costs one extra XLA relayout pass over the output).
    transposed_output=True: returns the lane-major [O, N, 4] layout with no
      extra output pass (== jnp.transpose(default_result, (2, 0, 1))).
    """
    N = x.shape[0]
    O = params[-1][0].shape[1]
    xT = flatten_input(x)
    out_t = mlps_forward_flat(xT, params, tile_m=tile_m, out_dtype=out_dtype,
                              mxu_bf16=mxu_bf16)
    if transposed_output:
        return out_t.reshape(O, N, 4)
    # TODO(synk): this relayout is an extra HBM pass; prefer transposed_output
    # (or mlps_forward_flat) and let the consumer absorb the transpose.
    return out_t.T.reshape(N, 4, O)


def init_params(key, input_size, hidden_sizes, output_size):
    """Deterministic init matching the module's layer shapes.

    Weights stored as [in, out] (transposed PyTorch layout); biases [1, out].
    """
    dims = [input_size] + list(hidden_sizes) + [output_size]
    params = []
    for i in range(len(dims) - 1):
        key, kw, kb = jax.random.split(key, 3)
        fan_in = dims[i]
        bound = 1.0 / (fan_in ** 0.5)            # PyTorch Linear default range
        w = jax.random.uniform(kw, (dims[i], dims[i + 1]),
                               minval=-bound, maxval=bound, dtype=jnp.float32)
        b = jax.random.uniform(kb, (1, dims[i + 1]),
                               minval=-bound, maxval=bound, dtype=jnp.float32)
        params.append((w, b))
    return params


def _reference_forward(x, params):
    (w0, b0), (w1, b1), (wo, bo) = params
    h = x[:, :4].astype(jnp.float32).reshape(-1, 1)
    h = jnp.maximum(h @ w0 + b0, 0.0)
    h = jnp.maximum(
        jnp.dot(h, w1, precision=jax.lax.Precision.HIGHEST) + b1, 0.0)
    out = jnp.dot(h, wo, precision=jax.lax.Precision.HIGHEST) + bo
    return out.reshape(x.shape[0], 4, wo.shape[1])


if __name__ == "__main__":
    # input_size must be 1 given the forward's unsqueeze(2) before input_layer.
    input_size = 1
    hidden_sizes = [32, 32]
    output_size = 8

    key = jax.random.PRNGKey(0)
    key, kx1, kx2 = jax.random.split(key, 3)
    params = init_params(key, input_size, hidden_sizes, output_size)

    fwd = jax.jit(mlps_forward)
    fwd_t = jax.jit(functools.partial(mlps_forward, transposed_output=True))
    fwd_bf16 = jax.jit(functools.partial(mlps_forward, mxu_bf16=True,
                                         out_dtype=jnp.bfloat16))

    # Small case matching the module's typical use (data.x : [N, F], F >= 4).
    x_small = jax.random.normal(kx1, (2, 6), dtype=jnp.float32)
    out_small = jax.block_until_ready(fwd(x_small, params))
    ref_small = _reference_forward(x_small, params)
    assert out_small.shape == (2, 4, output_size)
    assert jnp.allclose(out_small, ref_small, atol=1e-4, rtol=1e-4)

    # Larger case exercising the multi-step grid + padding path.
    x_big = jax.random.normal(kx2, (300, 6), dtype=jnp.float32)
    out_big = jax.block_until_ready(fwd(x_big, params))
    ref_big = _reference_forward(x_big, params)
    assert out_big.shape == (300, 4, output_size)
    assert jnp.allclose(out_big, ref_big, atol=1e-4, rtol=1e-4)

    # Lane-major fast path (no extra output relayout pass).
    out_t = jax.block_until_ready(fwd_t(x_big, params))
    assert out_t.shape == (output_size, 300, 4)
    assert jnp.allclose(out_t, jnp.transpose(ref_big, (2, 0, 1)),
                        atol=1e-4, rtol=1e-4)

    # bf16 MXU operands + bf16 output stream (memory-bound fast path); looser
    # tolerance because of the narrowed operands/stores.
    out_bf16 = jax.block_until_ready(fwd_bf16(x_big, params))
    assert out_bf16.dtype == jnp.bfloat16
    assert jnp.allclose(out_bf16.astype(jnp.float32), ref_big,
                        atol=5e-2, rtol=5e-2)

    print("KERNEL_OK")
</pallas_src>

<mosaic_0001>
module attributes {stable_mosaic.version = 11 : i64} {
  func.func @_mlp_kernel(%arg0: i32, %arg1: memref<1x256xf32, #tpu.memory_space<vmem>>, %arg2: memref<33x1xf32, #tpu.memory_space<vmem>>, %arg3: memref<33x1xf32, #tpu.memory_space<vmem>>, %arg4: memref<33x33xf32, #tpu.memory_space<vmem>>, %arg5: memref<8x33xf32, #tpu.memory_space<vmem>>, %arg6: memref<8x256xf32, #tpu.memory_space<vmem>>) attributes {dimension_semantics = [#tpu.dimension_semantics<parallel>], iteration_bounds = array<i64: 1>, scalar_prefetch = 0 : i64, scratch_operands = 0 : i64, tpu.core_type = #tpu.core_type<tc>, window_params = [{transform_indices = @transform_0, window_bounds = array<i64: 1, 256>}, {pipeline_mode = #tpu.pipeline_mode<synchronous>, transform_indices = @transform_1, window_bounds = array<i64: 33, 1>}, {pipeline_mode = #tpu.pipeline_mode<synchronous>, transform_indices = @transform_2, window_bounds = array<i64: 33, 1>}, {pipeline_mode = #tpu.pipeline_mode<synchronous>, transform_indices = @transform_3, window_bounds = array<i64: 33, 33>}, {pipeline_mode = #tpu.pipeline_mode<synchronous>, transform_indices = @transform_4, window_bounds = array<i64: 8, 33>}, {transform_indices = @transform_5, window_bounds = array<i64: 8, 256>}]} {
    %c0 = arith.constant 0 : index
    %c0_0 = arith.constant 0 : index
    %0 = vector.load %arg2[%c0, %c0_0] : memref<33x1xf32, #tpu.memory_space<vmem>>, vector<33x1xf32>
    %c0_1 = arith.constant 0 : index
    %c0_2 = arith.constant 0 : index
    %1 = vector.load %arg1[%c0_1, %c0_2] : memref<1x256xf32, #tpu.memory_space<vmem>>, vector<1x256xf32>
    %2 = vector.broadcast %0 : vector<33x1xf32> to vector<33x256xf32>
    %3 = vector.broadcast %1 : vector<1x256xf32> to vector<33x256xf32>
    %4 = arith.mulf %2, %3 : vector<33x256xf32>
    %c0_3 = arith.constant 0 : index
    %c0_4 = arith.constant 0 : index
    %5 = vector.load %arg3[%c0_3, %c0_4] : memref<33x1xf32, #tpu.memory_space<vmem>>, vector<33x1xf32>
    %6 = vector.broadcast %5 : vector<33x1xf32> to vector<33x256xf32>
    %7 = arith.addf %4, %6 : vector<33x256xf32>
    %cst = arith.constant 0.000000e+00 : f32
    %8 = vector.broadcast %cst : f32 to vector<33x256xf32>
    %9 = arith.maximumf %7, %8 : vector<33x256xf32>
    %c0_5 = arith.constant 0 : index
    %c0_6 = arith.constant 0 : index
    %10 = vector.load %arg4[%c0_5, %c0_6] : memref<33x33xf32, #tpu.memory_space<vmem>>, vector<33x33xf32>
    %cst_7 = arith.constant dense<0.000000e+00> : vector<33x256xf32>
    %11 = tpu.matmul %10, %9, %cst_7 {dimension_numbers = #tpu.dot_dimension_numbers<[1], [0], [0], [1], [0, 0, 1, 1], [], []>} : vector<33x33xf32>, vector<33x256xf32>, vector<33x256xf32> -> vector<33x256xf32>
    %cst_8 = arith.constant 0.000000e+00 : f32
    %12 = vector.broadcast %cst_8 : f32 to vector<33x256xf32>
    %13 = arith.maximumf %11, %12 : vector<33x256xf32>
    %c0_9 = arith.constant 0 : index
    %c0_10 = arith.constant 0 : index
    %14 = vector.load %arg5[%c0_9, %c0_10] : memref<8x33xf32, #tpu.memory_space<vmem>>, vector<8x33xf32>
    %cst_11 = arith.constant dense<0.000000e+00> : vector<8x256xf32>
    %15 = tpu.matmul %14, %13, %cst_11 {dimension_numbers = #tpu.dot_dimension_numbers<[1], [0], [0], [1], [0, 0, 1, 1], [], []>} : vector<8x33xf32>, vector<33x256xf32>, vector<8x256xf32> -> vector<8x256xf32>
    %c0_12 = arith.constant 0 : index
    %c0_13 = arith.constant 0 : index
    %16 = vector.load %arg6[%c0_12, %c0_13] : memref<8x256xf32, #tpu.memory_space<vmem>>, vector<8x256xf32>
    tpu.vector_store %arg6[%c0_12, %c0_13], %15 {strides = array<i32>} : memref<8x256xf32, #tpu.memory_space<vmem>>, vector<8x256xf32>,
    return
  }
  func.func @transform_0(%arg0: i32) -> (i32, i32) {
    %c0_i32 = arith.constant 0 : i32
    %c0_i32_0 = arith.constant 0 : i32
    return %c0_i32, %arg0 : i32, i32
  }
  func.func @transform_1(%arg0: i32) -> (i32, i32) {
    %c0_i32 = arith.constant 0 : i32
    %c0_i32_0 = arith.constant 0 : i32
    %c0_i32_1 = arith.constant 0 : i32
    return %c0_i32, %c0_i32_0 : i32, i32
  }
  func.func @transform_2(%arg0: i32) -> (i32, i32) {
    %c0_i32 = arith.constant 0 : i32
    %c0_i32_0 = arith.constant 0 : i32
    %c0_i32_1 = arith.constant 0 : i32
    return %c0_i32, %c0_i32_0 : i32, i32
  }
  func.func @transform_3(%arg0: i32) -> (i32, i32) {
    %c0_i32 = arith.constant 0 : i32
    %c0_i32_0 = arith.constant 0 : i32
    %c0_i32_1 = arith.constant 0 : i32
    return %c0_i32, %c0_i32_0 : i32, i32
  }
  func.func @transform_4(%arg0: i32) -> (i32, i32) {
    %c0_i32 = arith.constant 0 : i32
    %c0_i32_0 = arith.constant 0 : i32
    %c0_i32_1 = arith.constant 0 : i32
    return %c0_i32, %c0_i32_0 : i32, i32
  }
  func.func @transform_5(%arg0: i32) -> (i32, i32) {
    %c0_i32 = arith.constant 0 : i32
    %c0_i32_0 = arith.constant 0 : i32
    return %c0_i32, %arg0 : i32, i32
  }
}

</mosaic_0001>

<llo_original>
// kernel: mlps_forward.1
$region0: #{mlps_forward.1}
  #allocation0 [shape = 'u32[]', space=smem, size = 0x4, offset = 0x4, fixed_abs, tag = 'smem constant byte address 0x4 - core index']
  #allocation1 [shape = 'u32[144,128]{1,0:T(1,128)}', space=vmem, size = 0x12000, scoped, tag = 'internal scratch']
  %s0 = inlined_call_operand.vmem [shape: f32[1,256], index: 0, kind: input, shape index: {}]
  %s1 = inlined_call_operand.vmem [shape: f32[33,1], index: 1, kind: input, shape index: {}]
  %s2 = inlined_call_operand.vmem [shape: f32[33,1], index: 2, kind: input, shape index: {}]
  %s3 = inlined_call_operand.vmem [shape: f32[33,33], index: 3, kind: input, shape index: {}]
  %s4 = inlined_call_operand.vmem [shape: f32[8,33], index: 4, kind: input, shape index: {}]
  %s5 = inlined_call_operand.vmem [shape: f32[8,256], index: 5, kind: output, shape index: {}]
  %s6 = sld [smem:[#allocation0]]
  $region30: #{mlps_forward.1} parent=0
    _
  %s8 = ssub.s32 1, %s6
  %s9 = scalar_select 0, %s8, %s6
  // Predicated region
  $region2: #{mlps_forward.1} parent=0 // pred_check
    _
  $region3: #{mlps_forward.1} parent=0 // pred_check_branch
    %11 = sbr.rel (0) target = $region5
  $region4: #{mlps_forward.1} parent=0 // pred_region
    _
  $region5: #{mlps_forward.1} parent=0 // pred_fallthru
    _
  // Predicated region
  $region6: #{mlps_forward.1} parent=0 // pred_check
    _
  $region7: #{mlps_forward.1} parent=0 // pred_check_branch
    %13 = sbr.rel (0) target = $region9
  $region8: #{mlps_forward.1} parent=0 // pred_region
    _
  $region9: #{mlps_forward.1} parent=0 // pred_fallthru
    _
  // Predicated region
  $region10: #{mlps_forward.1} parent=0 // pred_check
    _
  $region11: #{mlps_forward.1} parent=0 // pred_check_branch
    %15 = sbr.rel (0) target = $region13
  $region12: #{mlps_forward.1} parent=0 // pred_region
    _
  $region13: #{mlps_forward.1} parent=0 // pred_fallthru
    _
  // Predicated region
  $region14: #{mlps_forward.1} parent=0 // pred_check
    _
  $region15: #{mlps_forward.1} parent=0 // pred_check_branch
    %17 = sbr.rel (0) target = $region17
  $region16: #{mlps_forward.1} parent=0 // pred_region
    _
  $region17: #{mlps_forward.1} parent=0 // pred_fallthru
    _
  // Predicated region
  $region18: #{mlps_forward.1} parent=0 // pred_check
    _
  $region19: #{mlps_forward.1} parent=0 // pred_check_branch
    %19 = sbr.rel (0) target = $region21
  $region20: #{mlps_forward.1} parent=0 // pred_region
    _
  $region21: #{mlps_forward.1} parent=0 // pred_fallthru
    _
  %v20 = vld [vmem:[%s1] sm:$0xff]
  %v21 = vld [vmem:[%s1 + $0x8] sm:$0xff]
  %v22 = vld [vmem:[%s1 + $0x10] sm:$0xff]
  %v23 = vld [vmem:[%s1 + $0x18] sm:$0xff]
  %v24 = vld [vmem:[%s1 + $0x20] sm:$0x1]
  %v25 = vld [vmem:[%s0] sm:$0x3]
  %27 = vset.pattern.permute.xlu0 0
  %28 = vperm.xlu0 %27, %v20
  %v29 = vpop.permute.xlu0 %28
  %32 = vset.pattern.permute.xlu0 0
  %33 = vperm.xlu0 %32, %v21
  %v34 = vpop.permute.xlu0 %33
  %37 = vset.pattern.permute.xlu0 0
  %38 = vperm.xlu0 %37, %v22
  %v39 = vpop.permute.xlu0 %38
  %42 = vset.pattern.permute.xlu0 0
  %43 = vperm.xlu0 %42, %v23
  %v44 = vpop.permute.xlu0 %43
  %47 = vset.pattern.permute.xlu0 0
  %48 = vperm.xlu0 %47, %v24
  %v49 = vpop.permute.xlu0 %48
  %v52 = vlaneseq
  %v53 = vshrl.u32 %v52, 7
  %v54 = vsub.s32 0, %v53
  %v55 = vrot.slane %v25, %v54
  %v56 = vlaneseq
  %v57 = vshrl.u32 %v56, 7
  %v58 = vsub.s32 1, %v57
  %v59 = vrot.slane %v25, %v58
  %v62 = vmul.f32 %v29, %v55
  %v63 = vmul.f32 %v29, %v59
  %v64 = vmul.f32 %v34, %v55
  %v65 = vmul.f32 %v34, %v59
  %v66 = vmul.f32 %v39, %v55
  %v67 = vmul.f32 %v39, %v59
  %v68 = vmul.f32 %v44, %v55
  %v69 = vmul.f32 %v44, %v59
  %v70 = vmul.f32 %v49, %v55
  %v71 = vmul.f32 %v49, %v59
  %v72 = vld [vmem:[%s2] sm:$0xff]
  %v73 = vld [vmem:[%s2 + $0x8] sm:$0xff]
  %v74 = vld [vmem:[%s2 + $0x10] sm:$0xff]
  %v75 = vld [vmem:[%s2 + $0x18] sm:$0xff]
  %v76 = vld [vmem:[%s2 + $0x20] sm:$0x1]
  %78 = vset.pattern.permute.xlu0 0
  %79 = vperm.xlu0 %78, %v72
  %v80 = vpop.permute.xlu0 %79
  %83 = vset.pattern.permute.xlu0 0
  %84 = vperm.xlu0 %83, %v73
  %v85 = vpop.permute.xlu0 %84
  %88 = vset.pattern.permute.xlu0 0
  %89 = vperm.xlu0 %88, %v74
  %v90 = vpop.permute.xlu0 %89
  %93 = vset.pattern.permute.xlu0 0
  %94 = vperm.xlu0 %93, %v75
  %v95 = vpop.permute.xlu0 %94
  %98 = vset.pattern.permute.xlu0 0
  %99 = vperm.xlu0 %98, %v76
  %v100 = vpop.permute.xlu0 %99
  %v102 = vadd.f32 %v62, %v80
  %v103 = vadd.f32 %v63, %v80
  %v104 = vadd.f32 %v64, %v85
  %v105 = vadd.f32 %v65, %v85
  %v106 = vadd.f32 %v66, %v90
  %v107 = vadd.f32 %v67, %v90
  %v108 = vadd.f32 %v68, %v95
  %v109 = vadd.f32 %v69, %v95
  %v110 = vadd.f32 %v70, %v100
  %v111 = vadd.f32 %v71, %v100
  %v112 = vmax.f32 %v102, 0.0
  %v113 = vmax.f32 %v103, 0.0
  %v114 = vmax.f32 %v104, 0.0
  %v115 = vmax.f32 %v105, 0.0
  %v116 = vmax.f32 %v106, 0.0
  %v117 = vmax.f32 %v107, 0.0
  %v118 = vmax.f32 %v108, 0.0
  %v119 = vmax.f32 %v109, 0.0
  %v120 = vmax.f32 %v110, 0.0
  %v121 = vmax.f32 %v111, 0.0
  %v122 = vld [vmem:[%s3] sm:$0xff]
  %v123 = vld [vmem:[%s3 + $0x8] sm:$0xff]
  %v124 = vld [vmem:[%s3 + $0x10] sm:$0xff]
  %v125 = vld [vmem:[%s3 + $0x18] sm:$0xff]
  %v126 = vld [vmem:[%s3 + $0x20] sm:$0x1]
  %vm127 = vcmask 269312
  %v129 = vsel %vm127, %v122, 0
  %v132 = vsel %vm127, %v123, 0
  %v135 = vsel %vm127, %v124, 0
  %v138 = vsel %vm127, %v125, 0
  %v141 = vsel %vm127, %v126, 0
  %vm143 = vcmask 1040384
  %v145 = vsel %vm143, %v120, 0
  %v148 = vsel %vm143, %v121, 0
  %150 = vmatprep.subr.mxu0 %v113
  %151 = vmatpush1.msra.mxu0 %v112
  %152 = vmatprep.subr.mxu0 %v115
  %153 = vmatpush1.msra.mxu0 %v114
  %154 = vmatprep.subr.mxu0 %v117
  %155 = vmatpush1.msra.mxu0 %v116
  %156 = vmatprep.subr.mxu0 %v119
  %157 = vmatpush1.msra.mxu0 %v118
  %158 = vmatprep.subr.mxu0 %v148
  %159 = vmatpush1.msra.mxu0 %v145
  %160 = vmatprep.subr.mxu0 0.0
  %161 = vmatpush1.msra.mxu0 0.0
  %162 = vmatprep.subr.mxu0 0.0
  %163 = vmatpush1.msra.mxu0 0.0
  %164 = vmatprep.subr.mxu0 0.0
  %165 = vmatpush1.msra.mxu0 0.0
  %166 = vmatprep.subr.mxu0 0.0
  %167 = vmatpush1.msra.mxu0 0.0
  %168 = vmatprep.subr.mxu0 0.0
  %169 = vmatpush1.msra.mxu0 0.0
  %170 = vmatprep.subr.mxu0 0.0
  %171 = vmatpush1.msra.mxu0 0.0
  %172 = vmatprep.subr.mxu0 0.0
  %173 = vmatpush1.msra.mxu0 0.0
  %174 = vmatprep.subr.mxu0 0.0
  %175 = vmatpush1.msra.mxu0 0.0
  %176 = vmatprep.subr.mxu0 0.0
  %177 = vmatpush1.msra.mxu0 0.0
  %178 = vmatprep.subr.mxu0 0.0
  %179 = vmatpush1.msra.mxu0 0.0
  %180 = vmatprep.subr.mxu0 0.0
  %181 = vmatpush1.msra.mxu0 0.0
  %182 = vmatprep.subr.mxu0 0.0
  %183 = vmatpush1.msra.mxu0 0.0
  %184 = vmatprep.subr.mxu0 0.0
  %185 = vmatpush1.msra.mxu0 0.0
  %186 = vmatprep.subr.mxu0 0.0
  %187 = vmatpush1.msra.mxu0 0.0
  %188 = vmatprep.subr.mxu0 0.0
  %189 = vmatpush1.msra.mxu0 0.0
  %190 = vmatprep.subr.mxu0 0.0
  %191 = vmatpush1.msra.mxu0 0.0
  %192 = vmatprep.subr.mxu0 0.0
  %193 = vmatpush1.msra.mxu0 0.0
  %194 = vmatprep.subr.mxu0 0.0
  %195 = vmatpush1.msra.mxu0 0.0
  %196 = vmatprep.subr.mxu0 0.0
  %197 = vmatpush1.msra.mxu0 0.0
  %198 = vmatprep.subr.mxu0 0.0
  %199 = vmatpush1.msra.mxu0 0.0
  %200 = vmatprep.subr.mxu0 0.0
  %201 = vmatpush1.msra.mxu0 0.0
  %202 = vmatprep.subr.mxu0 0.0
  %203 = vmatpush1.msra.mxu0 0.0
  %204 = vmatprep.subr.mxu0 0.0
  %205 = vmatpush1.msra.mxu0 0.0
  %206 = vmatprep.subr.mxu0 0.0
  %207 = vmatpush1.msra.mxu0 0.0
  %208 = vmatprep.subr.mxu0 0.0
  %209 = vmatpush1.msra.mxu0 0.0
  %210 = vmatprep.subr.mxu0 0.0
  %211 = vmatpush1.msra.mxu0 0.0
  %212 = vmatprep.subr.mxu0 0.0
  %213 = vmatpush1.msra.mxu0 0.0
  %214 = vmatprep.mubr.f32.mxu0 0.0
  %215 = vmatmul.mubr.f32.gmra.mrb[0].mxu0 %v129
  %v216 = vpop.f32.mrb[0].mxu0
  %v217 = vadd.f32 0.0, %v216
  %v218 = vpop.f32.mrb[0].mxu0
  %v219 = vadd.f32 0.0, %v218
  %220 = vmatprep.mubr.f32.mxu0 0.0
  %221 = vmatmul.mubr.f32.gmra.mrb[0].mxu0 %v132
  %v222 = vpop.f32.mrb[0].mxu0
  %v223 = vadd.f32 0.0, %v222
  %v224 = vpop.f32.mrb[0].mxu0
  %v225 = vadd.f32 0.0, %v224
  %226 = vmatprep.mubr.f32.mxu0 0.0
  %227 = vmatmul.mubr.f32.gmra.mrb[0].mxu0 %v135
  %v228 = vpop.f32.mrb[0].mxu0
  %v229 = vadd.f32 0.0, %v228
  %v230 = vpop.f32.mrb[0].mxu0
  %v231 = vadd.f32 0.0, %v230
  %232 = vmatprep.mubr.f32.mxu0 0.0
  %233 = vmatmul.mubr.f32.gmra.mrb[0].mxu0 %v138
  %v234 = vpop.f32.mrb[0].mxu0
  %v235 = vadd.f32 0.0, %v234
  %v236 = vpop.f32.mrb[0].mxu0
  %v237 = vadd.f32 0.0, %v236
  %238 = vmatprep.mubr.f32.mxu0 0.0
  %239 = vmatmul.mubr.f32.gmra.mrb[0].mxu0 %v141
  %v240 = vpop.f32.mrb[0].mxu0
  %v241 = vadd.f32 0.0, %v240
  %v242 = vpop.f32.mrb[0].mxu0
  %v243 = vadd.f32 0.0, %v242
  %244 = vdwg.mxu0
  %v245 = vmax.f32 %v217, 0.0
  %v246 = vmax.f32 %v219, 0.0
  %v247 = vmax.f32 %v223, 0.0
  %v248 = vmax.f32 %v225, 0.0
  %v249 = vmax.f32 %v229, 0.0
  %v250 = vmax.f32 %v231, 0.0
  %v251 = vmax.f32 %v235, 0.0
  %v252 = vmax.f32 %v237, 0.0
  %v253 = vmax.f32 %v241, 0.0
  %v254 = vmax.f32 %v243, 0.0
  %v255 = vld [vmem:[%s4] sm:$0xff]
  %v257 = vsel %vm127, %v255, 0
  %v260 = vsel %vm143, %v253, 0
  %v263 = vsel %vm143, %v254, 0
  %265 = vmatprep.subr.mxu0 %v246
  %266 = vmatpush1.msra.mxu0 %v245
  %267 = vmatprep.subr.mxu0 %v248
  %268 = vmatpush1.msra.mxu0 %v247
  %269 = vmatprep.subr.mxu0 %v250
  %270 = vmatpush1.msra.mxu0 %v249
  %271 = vmatprep.subr.mxu0 %v252
  %272 = vmatpush1.msra.mxu0 %v251
  %273 = vmatprep.subr.mxu0 %v263
  %274 = vmatpush1.msra.mxu0 %v260
  %275 = vmatprep.subr.mxu0 0.0
  %276 = vmatpush1.msra.mxu0 0.0
  %277 = vmatprep.subr.mxu0 0.0
  %278 = vmatpush1.msra.mxu0 0.0
  %279 = vmatprep.subr.mxu0 0.0
  %280 = vmatpush1.msra.mxu0 0.0
  %281 = vmatprep.subr.mxu0 0.0
  %282 = vmatpush1.msra.mxu0 0.0
  %283 = vmatprep.subr.mxu0 0.0
  %284 = vmatpush1.msra.mxu0 0.0
  %285 = vmatprep.subr.mxu0 0.0
  %286 = vmatpush1.msra.mxu0 0.0
  %287 = vmatprep.subr.mxu0 0.0
  %288 = vmatpush1.msra.mxu0 0.0
  %289 = vmatprep.subr.mxu0 0.0
  %290 = vmatpush1.msra.mxu0 0.0
  %291 = vmatprep.subr.mxu0 0.0
  %292 = vmatpush1.msra.mxu0 0.0
  %293 = vmatprep.subr.mxu0 0.0
  %294 = vmatpush1.msra.mxu0 0.0
  %295 = vmatprep.subr.mxu0 0.0
  %296 = vmatpush1.msra.mxu0 0.0
  %297 = vmatprep.subr.mxu0 0.0
  %298 = vmatpush1.msra.mxu0 0.0
  %299 = vmatprep.subr.mxu0 0.0
  %300 = vmatpush1.msra.mxu0 0.0
  %301 = vmatprep.subr.mxu0 0.0
  %302 = vmatpush1.msra.mxu0 0.0
  %303 = vmatprep.subr.mxu0 0.0
  %304 = vmatpush1.msra.mxu0 0.0
  %305 = vmatprep.subr.mxu0 0.0
  %306 = vmatpush1.msra.mxu0 0.0
  %307 = vmatprep.subr.mxu0 0.0
  %308 = vmatpush1.msra.mxu0 0.0
  %309 = vmatprep.subr.mxu0 0.0
  %310 = vmatpush1.msra.mxu0 0.0
  %311 = vmatprep.subr.mxu0 0.0
  %312 = vmatpush1.msra.mxu0 0.0
  %313 = vmatprep.subr.mxu0 0.0
  %314 = vmatpush1.msra.mxu0 0.0
  %315 = vmatprep.subr.mxu0 0.0
  %316 = vmatpush1.msra.mxu0 0.0
  %317 = vmatprep.subr.mxu0 0.0
  %318 = vmatpush1.msra.mxu0 0.0
  %319 = vmatprep.subr.mxu0 0.0
  %320 = vmatpush1.msra.mxu0 0.0
  %321 = vmatprep.subr.mxu0 0.0
  %322 = vmatpush1.msra.mxu0 0.0
  %323 = vmatprep.subr.mxu0 0.0
  %324 = vmatpush1.msra.mxu0 0.0
  %325 = vmatprep.subr.mxu0 0.0
  %326 = vmatpush1.msra.mxu0 0.0
  %327 = vmatprep.subr.mxu0 0.0
  %328 = vmatpush1.msra.mxu0 0.0
  %329 = vmatprep.mubr.f32.mxu0 0.0
  %330 = vmatmul.mubr.f32.gmra.mrb[0].mxu0 %v257
  %v331 = vpop.f32.mrb[0].mxu0
  %v332 = vadd.f32 0.0, %v331
  %v333 = vpop.f32.mrb[0].mxu0
  %v334 = vadd.f32 0.0, %v333
  %335 = vdwg.mxu0
  %336 = vst [vmem:[%s5] sm:$0xff] %v332
  %337 = vst [vmem:[%s5 + $0x8] sm:$0xff] %v334
  // Predicated region
  $region22: #{mlps_forward.1} parent=0 // pred_check
    _
  $region23: #{mlps_forward.1} parent=0 // pred_check_branch
    %339 = sbr.rel (0) target = $region25
  $region24: #{mlps_forward.1} parent=0 // pred_region
    _
  $region25: #{mlps_forward.1} parent=0 // pred_fallthru
    _
  // Predicated region
  $region26: #{mlps_forward.1} parent=0 // pred_check
    _
  $region27: #{mlps_forward.1} parent=0 // pred_check_branch
    %341 = sbr.rel (0) target = $region29
  $region28: #{mlps_forward.1} parent=0 // pred_region
    _
  $region29: #{mlps_forward.1} parent=0 // pred_fallthru
    _

</llo_original>
